<compile_context>
chip_gen: v7x
topology: tpu7x:2x2x1
jax: 0.10.0
libtpu: 0.0.40
codegen_flags: <defaults>
</compile_context>

<pallas_src>
import functools

import jax
import jax.numpy as jnp
from jax.experimental import pallas as pl
from jax.experimental.pallas import tpu as pltpu

EMBEDDING_SIZE = 100
NUM_CLASSES = 2
KSIZES = (3, 4, 5)                 # conv1 / conv2 / conv3 kernel heights
KMAX = KSIZES[-1]
NUM_FILTERS = len(KSIZES)
TILE_B = 512                       # batch tile (post-restructure VMEM is tiny)


def _cdiv(a, b):
    return -(-a // b)


def _round_up(a, m):
    return _cdiv(a, m) * m


def _make_kernel(tile_b, S, E, num_classes):
    rows = tile_b * S
    nf = NUM_FILTERS

    def kernel(x_ref, wbig_ref, wl_ref, bl_ref, out_ref):
        # Flatten (tb, S, E) -> (rows, E); cast to bf16 for a single-pass MXU
        # matmul (accumulation stays f32).
        x2 = x_ref[...].reshape(rows, E).astype(jnp.bfloat16)

        # One matmul computes every per-row/per-k partial product:
        #   y[r, k*nf + c] = dot(x2[r], w_c[k])   (zero column for k >= K_c)
        y = jnp.dot(x2, wbig_ref[...],
                    preferred_element_type=jnp.float32)       # (rows, 15) f32

        # conv_c[r] = sum_k y[r + k, k*nf + c]: reconstruct with sublane rolls
        # + adds on the small (rows, nf) column slices.  Rows whose window
        # crosses a sequence (or tile) boundary are garbage; they are dropped
        # by the static valid-length slices below, so the circular wrap of the
        # roll never leaks into the result.
        acc = y[:, 0:nf]
        for k in range(1, KMAX):
            acc = acc + pltpu.roll(y[:, k * nf:(k + 1) * nf], rows - k, 0)

        # Max-pool over the valid extent (== F.max_pool2d over (S-K+1, 1)),
        # with static per-filter sequence slices (no iota mask / sentinel).
        acc3 = acc.reshape(tile_b, S, nf)
        feats = []
        for c, K in enumerate(KSIZES):
            L = S - K + 1
            feats.append(jnp.max(acc3[:, :L, c:c + 1], axis=1))  # (tile_b, 1)
        feat = jnp.concatenate(feats, axis=1)                    # (tile_b, nf)

        # Linear(3 -> num_classes) on the VPU; conv biases are pre-folded into
        # bl on the host, weights are read as scalars from SMEM.
        cols = []
        for c in range(num_classes):
            col = bl_ref[0, c] + feat[:, 0:1] * wl_ref[0, c]
            for f in range(1, nf):
                col = col + feat[:, f:f + 1] * wl_ref[f, c]
            cols.append(col)
        logits = jnp.concatenate(cols, axis=1)                   # (tile_b, NC)

        # Softmax(dim=1).
        z = logits - jnp.max(logits, axis=1, keepdims=True)
        e = jnp.exp(z)
        out_ref[...] = (e / jnp.sum(e, axis=1, keepdims=True)).astype(
            out_ref.dtype)

    return kernel


def pack_params(params):
    """One-time host-side packing (call outside the jitted per-call path).

    Builds the fused pre-transposed conv weight (bf16 MXU operand), the
    pre-transposed linear weight, and folds the conv biases into the linear
    bias (max_i(y_i + b) == max_i(y_i) + b)."""
    E = params["w1"].shape[1]
    ws = (params["w1"], params["w2"], params["w3"])
    cols = []
    for k in range(KMAX):
        for K, w in zip(KSIZES, ws):
            cols.append(w[k].astype(jnp.float32) if k < K
                        else jnp.zeros((E,), jnp.float32))
    wbig = jnp.stack(cols, axis=1).astype(jnp.bfloat16)          # (E, KMAX*NF)
    wl_t = params["wl"].T.astype(jnp.float32)                    # (3, NC)
    b_vec = jnp.stack([params["b1"][0, 0], params["b2"][0, 0],
                       params["b3"][0, 0]]).astype(jnp.float32)  # (3,)
    bl_fold = b_vec[None, :] @ wl_t + params["bl"].astype(jnp.float32)  # (1,NC)
    return {"wbig": wbig, "wl_t": wl_t, "bl_fold": bl_fold}


@functools.partial(jax.jit, static_argnames=("tile_b",))
def textcnn_forward(x, packed, *, tile_b=TILE_B):
    B, S, E = x.shape
    assert S >= KMAX, "sequence must be at least the largest conv kernel (5)"
    nc = packed["wl_t"].shape[1]

    # Batch tile: cap at tile_b, and when B is large enough force >= 2 grid
    # steps so the "parallel" axis can shard across v7x's two TensorCores.
    tb = min(tile_b, B)
    if B >= 16 and _cdiv(B, tb) < 2:
        tb = min(tb, _round_up(_cdiv(B, 2), 8))
    b_pad = _round_up(B, tb)

    xp = x.astype(jnp.float32)
    if b_pad != B:
        xp = jnp.pad(xp, ((0, b_pad - B), (0, 0), (0, 0)))

    kernel = _make_kernel(tb, S, E, nc)
    smem = pltpu.MemorySpace.SMEM
    out = pl.pallas_call(
        kernel,
        out_shape=jax.ShapeDtypeStruct((b_pad, nc), jnp.float32),
        grid=(b_pad // tb,),
        in_specs=[
            # batch-tiled activation (auto double-buffered pipeline); last dim
            # stays E=100 (full extent) -- no host-side lane pad
            pl.BlockSpec((tb, S, E), lambda i: (i, 0, 0)),
            # fused bf16 conv weight, resident in VMEM (block index constant)
            pl.BlockSpec((E, KMAX * NUM_FILTERS), lambda i: (0, 0)),
            # tiny linear weight / folded bias as scalar tables in SMEM
            pl.BlockSpec(memory_space=smem),
            pl.BlockSpec(memory_space=smem),
        ],
        out_specs=pl.BlockSpec((tb, nc), lambda i: (i, 0)),
        compiler_params=pltpu.CompilerParams(
            dimension_semantics=("parallel",)),
    )(xp, packed["wbig"], packed["wl_t"], packed["bl_fold"])
    return out[:B]


def init_params(key, E, num_classes):
    ks = jax.random.split(key, 8)
    scale = 0.1
    return {
        "w1": scale * jax.random.normal(ks[0], (3, E), jnp.float32),
        "b1": scale * jax.random.normal(ks[1], (1, 1), jnp.float32),
        "w2": scale * jax.random.normal(ks[2], (4, E), jnp.float32),
        "b2": scale * jax.random.normal(ks[3], (1, 1), jnp.float32),
        "w3": scale * jax.random.normal(ks[4], (5, E), jnp.float32),
        "b3": scale * jax.random.normal(ks[5], (1, 1), jnp.float32),
        "wl": scale * jax.random.normal(ks[6], (num_classes, 3), jnp.float32),
        "bl": scale * jax.random.normal(ks[7], (1, num_classes), jnp.float32),
    }


def ref_forward(x, params):
    """Pure-JAX f32 reference replicating the PyTorch forward."""
    def conv_then_max(w, b, K):
        B, S, E = x.shape
        L = S - K + 1
        windows = jnp.stack([x[:, i:i + K, :] for i in range(L)], axis=1)
        y = jnp.einsum("blke,ke->bl", windows, w) + b[0, 0]
        return jnp.max(y, axis=1, keepdims=True)

    m1 = conv_then_max(params["w1"], params["b1"], 3)
    m2 = conv_then_max(params["w2"], params["b2"], 4)
    m3 = conv_then_max(params["w3"], params["b3"], 5)
    feat = jnp.concatenate([m1, m2, m3], axis=1)
    logits = feat @ params["wl"].T + params["bl"]
    return jax.nn.softmax(logits, axis=1)


if __name__ == "__main__":
    B, S, E = 2, 8, EMBEDDING_SIZE        # batch=2, seq_len=8, embedding=100
    key = jax.random.PRNGKey(0)
    kx, kp = jax.random.split(key)
    x = jax.random.normal(kx, (B, S, E), jnp.float32)
    params = init_params(kp, E, NUM_CLASSES)
    packed = pack_params(params)          # one-time packing, outside jit path

    out = jax.block_until_ready(textcnn_forward(x, packed))
    ref = ref_forward(x, params)

    assert out.shape == (B, NUM_CLASSES)
    # bf16 MXU inputs (f32 accumulation) -> relaxed parity vs f32 reference.
    assert jnp.allclose(out, ref, atol=2e-2, rtol=2e-2), (out, ref)
    print("KERNEL_OK")
</pallas_src>

<mosaic_0001>
module attributes {stable_mosaic.version = 11 : i64} {
  func.func @kernel(%arg0: i32, %arg1: memref<2x8x100xf32, #tpu.memory_space<vmem>>, %arg2: memref<100x15xbf16, #tpu.memory_space<vmem>>, %arg3: memref<3x2xf32, #tpu.memory_space<smem>>, %arg4: memref<1x2xf32, #tpu.memory_space<smem>>, %arg5: memref<2x2xf32, #tpu.memory_space<vmem>>) attributes {dimension_semantics = [#tpu.dimension_semantics<parallel>], iteration_bounds = array<i64: 1>, scalar_prefetch = 0 : i64, scratch_operands = 0 : i64, tpu.core_type = #tpu.core_type<tc>, window_params = [{transform_indices = @transform_0, window_bounds = array<i64: 2, 8, 100>}, {pipeline_mode = #tpu.pipeline_mode<synchronous>, transform_indices = @transform_1, window_bounds = array<i64: 100, 15>}, {transform_indices = @transform_2, window_bounds = array<i64: 3, 2>}, {transform_indices = @transform_3, window_bounds = array<i64: 1, 2>}, {transform_indices = @transform_4, window_bounds = array<i64: 2, 2>}]} {
    %c0 = arith.constant 0 : index
    %c0_0 = arith.constant 0 : index
    %c0_1 = arith.constant 0 : index
    %0 = vector.load %arg1[%c0, %c0_0, %c0_1] : memref<2x8x100xf32, #tpu.memory_space<vmem>>, vector<2x8x100xf32>
    %1 = vector.shape_cast %0 : vector<2x8x100xf32> to vector<16x100xf32>
    %2 = arith.truncf %1 : vector<16x100xf32> to vector<16x100xbf16>
    %c0_2 = arith.constant 0 : index
    %c0_3 = arith.constant 0 : index
    %3 = vector.load %arg2[%c0_2, %c0_3] : memref<100x15xbf16, #tpu.memory_space<vmem>>, vector<100x15xbf16>
    %cst = arith.constant dense<0.000000e+00> : vector<16x15xf32>
    %4 = tpu.matmul %2, %3, %cst {dimension_numbers = #tpu.dot_dimension_numbers<[1], [0], [0], [1], [0, 0, 1, 1], [], []>} : vector<16x100xbf16>, vector<100x15xbf16>, vector<16x15xf32> -> vector<16x15xf32>
    %5 = vector.extract_strided_slice %4 {offsets = [0, 0], sizes = [16, 3], strides = [1, 1]} : vector<16x15xf32> to vector<16x3xf32>
    %6 = vector.extract_strided_slice %4 {offsets = [0, 3], sizes = [16, 3], strides = [1, 1]} : vector<16x15xf32> to vector<16x3xf32>
    %c15_i32 = arith.constant 15 : i32
    %7 = tpu.dynamic_rotate %6 by %c15_i32 dim 0 : vector<16x3xf32>, i32 -> vector<16x3xf32>
    %8 = arith.addf %5, %7 : vector<16x3xf32>
    %9 = vector.extract_strided_slice %4 {offsets = [0, 6], sizes = [16, 3], strides = [1, 1]} : vector<16x15xf32> to vector<16x3xf32>
    %c14_i32 = arith.constant 14 : i32
    %10 = tpu.dynamic_rotate %9 by %c14_i32 dim 0 : vector<16x3xf32>, i32 -> vector<16x3xf32>
    %11 = arith.addf %8, %10 : vector<16x3xf32>
    %12 = vector.extract_strided_slice %4 {offsets = [0, 9], sizes = [16, 3], strides = [1, 1]} : vector<16x15xf32> to vector<16x3xf32>
    %c13_i32 = arith.constant 13 : i32
    %13 = tpu.dynamic_rotate %12 by %c13_i32 dim 0 : vector<16x3xf32>, i32 -> vector<16x3xf32>
    %14 = arith.addf %11, %13 : vector<16x3xf32>
    %15 = vector.extract_strided_slice %4 {offsets = [0, 12], sizes = [16, 3], strides = [1, 1]} : vector<16x15xf32> to vector<16x3xf32>
    %c12_i32 = arith.constant 12 : i32
    %16 = tpu.dynamic_rotate %15 by %c12_i32 dim 0 : vector<16x3xf32>, i32 -> vector<16x3xf32>
    %17 = arith.addf %14, %16 : vector<16x3xf32>
    %18 = vector.shape_cast %17 : vector<16x3xf32> to vector<2x8x3xf32>
    %19 = vector.extract_strided_slice %18 {offsets = [0, 0, 0], sizes = [2, 6, 1], strides = [1, 1, 1]} : vector<2x8x3xf32> to vector<2x6x1xf32>
    %cst_4 = arith.constant dense<0xFF800000> : vector<2x1xf32>
    %20 = vector.multi_reduction <maximumf>, %19, %cst_4 [1] : vector<2x6x1xf32> to vector<2x1xf32>
    %21 = vector.extract_strided_slice %18 {offsets = [0, 0, 1], sizes = [2, 5, 1], strides = [1, 1, 1]} : vector<2x8x3xf32> to vector<2x5x1xf32>
    %cst_5 = arith.constant dense<0xFF800000> : vector<2x1xf32>
    %22 = vector.multi_reduction <maximumf>, %21, %cst_5 [1] : vector<2x5x1xf32> to vector<2x1xf32>
    %23 = vector.extract_strided_slice %18 {offsets = [0, 0, 2], sizes = [2, 4, 1], strides = [1, 1, 1]} : vector<2x8x3xf32> to vector<2x4x1xf32>
    %cst_6 = arith.constant dense<0xFF800000> : vector<2x1xf32>
    %24 = vector.multi_reduction <maximumf>, %23, %cst_6 [1] : vector<2x4x1xf32> to vector<2x1xf32>
    %25 = tpu.concatenate %20, %22, %24 in 1 : vector<2x1xf32>, vector<2x1xf32>, vector<2x1xf32> -> vector<2x3xf32>
    %c0_7 = arith.constant 0 : index
    %c0_8 = arith.constant 0 : index
    %26 = memref.load %arg4[%c0_7, %c0_8] : memref<1x2xf32, #tpu.memory_space<smem>>
    %27 = vector.extract_strided_slice %25 {offsets = [0, 0], sizes = [2, 1], strides = [1, 1]} : vector<2x3xf32> to vector<2x1xf32>
    %c0_9 = arith.constant 0 : index
    %c0_10 = arith.constant 0 : index
    %28 = memref.load %arg3[%c0_9, %c0_10] : memref<3x2xf32, #tpu.memory_space<smem>>
    %29 = vector.broadcast %28 : f32 to vector<2x1xf32>
    %30 = arith.mulf %27, %29 : vector<2x1xf32>
    %31 = vector.broadcast %26 : f32 to vector<2x1xf32>
    %32 = arith.addf %31, %30 : vector<2x1xf32>
    %33 = vector.extract_strided_slice %25 {offsets = [0, 1], sizes = [2, 1], strides = [1, 1]} : vector<2x3xf32> to vector<2x1xf32>
    %c1 = arith.constant 1 : index
    %c0_11 = arith.constant 0 : index
    %34 = memref.load %arg3[%c1, %c0_11] : memref<3x2xf32, #tpu.memory_space<smem>>
    %35 = vector.broadcast %34 : f32 to vector<2x1xf32>
    %36 = arith.mulf %33, %35 : vector<2x1xf32>
    %37 = arith.addf %32, %36 : vector<2x1xf32>
    %38 = vector.extract_strided_slice %25 {offsets = [0, 2], sizes = [2, 1], strides = [1, 1]} : vector<2x3xf32> to vector<2x1xf32>
    %c2 = arith.constant 2 : index
    %c0_12 = arith.constant 0 : index
    %39 = memref.load %arg3[%c2, %c0_12] : memref<3x2xf32, #tpu.memory_space<smem>>
    %40 = vector.broadcast %39 : f32 to vector<2x1xf32>
    %41 = arith.mulf %38, %40 : vector<2x1xf32>
    %42 = arith.addf %37, %41 : vector<2x1xf32>
    %c0_13 = arith.constant 0 : index
    %c1_14 = arith.constant 1 : index
    %43 = memref.load %arg4[%c0_13, %c1_14] : memref<1x2xf32, #tpu.memory_space<smem>>
    %44 = vector.extract_strided_slice %25 {offsets = [0, 0], sizes = [2, 1], strides = [1, 1]} : vector<2x3xf32> to vector<2x1xf32>
    %c0_15 = arith.constant 0 : index
    %c1_16 = arith.constant 1 : index
    %45 = memref.load %arg3[%c0_15, %c1_16] : memref<3x2xf32, #tpu.memory_space<smem>>
    %46 = vector.broadcast %45 : f32 to vector<2x1xf32>
    %47 = arith.mulf %44, %46 : vector<2x1xf32>
    %48 = vector.broadcast %43 : f32 to vector<2x1xf32>
    %49 = arith.addf %48, %47 : vector<2x1xf32>
    %50 = vector.extract_strided_slice %25 {offsets = [0, 1], sizes = [2, 1], strides = [1, 1]} : vector<2x3xf32> to vector<2x1xf32>
    %c1_17 = arith.constant 1 : index
    %c1_18 = arith.constant 1 : index
    %51 = memref.load %arg3[%c1_17, %c1_18] : memref<3x2xf32, #tpu.memory_space<smem>>
    %52 = vector.broadcast %51 : f32 to vector<2x1xf32>
    %53 = arith.mulf %50, %52 : vector<2x1xf32>
    %54 = arith.addf %49, %53 : vector<2x1xf32>
    %55 = vector.extract_strided_slice %25 {offsets = [0, 2], sizes = [2, 1], strides = [1, 1]} : vector<2x3xf32> to vector<2x1xf32>
    %c2_19 = arith.constant 2 : index
    %c1_20 = arith.constant 1 : index
    %56 = memref.load %arg3[%c2_19, %c1_20] : memref<3x2xf32, #tpu.memory_space<smem>>
    %57 = vector.broadcast %56 : f32 to vector<2x1xf32>
    %58 = arith.mulf %55, %57 : vector<2x1xf32>
    %59 = arith.addf %54, %58 : vector<2x1xf32>
    %60 = tpu.concatenate %42, %59 in 1 : vector<2x1xf32>, vector<2x1xf32> -> vector<2x2xf32>
    %cst_21 = arith.constant dense<0xFF800000> : vector<2xf32>
    %61 = vector.multi_reduction <maximumf>, %60, %cst_21 [1] : vector<2x2xf32> to vector<2xf32>
    %62 = vector.shape_cast %61 : vector<2xf32> to vector<2x1xf32>
    %63 = vector.broadcast %62 : vector<2x1xf32> to vector<2x2xf32>
    %64 = arith.subf %60, %63 : vector<2x2xf32>
    %65 = math.exp %64 : vector<2x2xf32>
    %cst_22 = arith.constant dense<0.000000e+00> : vector<2xf32>
    %66 = vector.multi_reduction <add>, %65, %cst_22 [1] : vector<2x2xf32> to vector<2xf32>
    %67 = vector.shape_cast %66 : vector<2xf32> to vector<2x1xf32>
    %68 = vector.broadcast %67 : vector<2x1xf32> to vector<2x2xf32>
    %69 = arith.divf %65, %68 : vector<2x2xf32>
    %c0_23 = arith.constant 0 : index
    %c0_24 = arith.constant 0 : index
    %70 = vector.load %arg5[%c0_23, %c0_24] : memref<2x2xf32, #tpu.memory_space<vmem>>, vector<2x2xf32>
    tpu.vector_store %arg5[%c0_23, %c0_24], %69 {strides = array<i32>} : memref<2x2xf32, #tpu.memory_space<vmem>>, vector<2x2xf32>,
    return
  }
  func.func @transform_0(%arg0: i32) -> (i32, i32, i32) {
    %c0_i32 = arith.constant 0 : i32
    %c0_i32_0 = arith.constant 0 : i32
    %c0_i32_1 = arith.constant 0 : i32
    return %arg0, %c0_i32, %c0_i32_0 : i32, i32, i32
  }
  func.func @transform_1(%arg0: i32) -> (i32, i32) {
    %c0_i32 = arith.constant 0 : i32
    %c0_i32_0 = arith.constant 0 : i32
    %c0_i32_1 = arith.constant 0 : i32
    return %c0_i32, %c0_i32_0 : i32, i32
  }
  func.func @transform_2(%arg0: i32) -> (i32, i32) {
    %c0_i32 = arith.constant 0 : i32
    %c0_i32_0 = arith.constant 0 : i32
    %c0_i32_1 = arith.constant 0 : i32
    return %c0_i32, %c0_i32_0 : i32, i32
  }
  func.func @transform_3(%arg0: i32) -> (i32, i32) {
    %c0_i32 = arith.constant 0 : i32
    %c0_i32_0 = arith.constant 0 : i32
    %c0_i32_1 = arith.constant 0 : i32
    return %c0_i32, %c0_i32_0 : i32, i32
  }
  func.func @transform_4(%arg0: i32) -> (i32, i32) {
    %c0_i32 = arith.constant 0 : i32
    %c0_i32_0 = arith.constant 0 : i32
    return %arg0, %c0_i32 : i32, i32
  }
}

</mosaic_0001>

<llo_original>
// kernel: textcnn_forward.1
$region0: #{textcnn_forward.1}
  #allocation0 [shape = 'u32[]', space=smem, size = 0x4, offset = 0x4, fixed_abs, tag = 'smem constant byte address 0x4 - core index']
  #allocation1 [shape = 'u32[144,128]{1,0:T(1,128)}', space=vmem, size = 0x12000, scoped, tag = 'internal scratch']
  %s0 = inlined_call_operand.vmem [shape: f32[2,8,100], index: 0, kind: input, shape index: {}]
  %s1 = inlined_call_operand.vmem [shape: bf16[100,15], index: 1, kind: input, shape index: {}]
  %s2 = inlined_call_operand.vmem [shape: f32[3,2], index: 2, kind: input, shape index: {}]
  %s3 = inlined_call_operand.vmem [shape: f32[1,2], index: 3, kind: input, shape index: {}]
  %s4 = inlined_call_operand.hbm [shape: f32[2,2], index: 4, kind: output, shape index: {}]
  %s5 = sld [smem:[#allocation0]]
  $region34: #{textcnn_forward.1} parent=0
    _
  %s7 = ssub.s32 1, %s5
  %s8 = scalar_select 0, %s7, %s5
  $region1: #{textcnn_forward.1} parent=0
    #allocation2 [shape = 'u8[2048]{0}', space=smem, size = 0x800, scoped, tag = 'input window, operand 2, single buffered']
    #allocation3 [shape = 's32[1]{0}', space=sflag, size = 0x4, scoped, tag = 'scoped memory for textcnn_forward.1']
    #allocation4 [shape = 's32[1]{0}', space=sflag, size = 0x4, scoped, tag = 'scoped memory for textcnn_forward.1']
    #allocation5 [shape = 'u8[512]{0}', space=smem, size = 0x200, scoped, tag = 'input window, operand 3, single buffered']
    #allocation6 [shape = 's32[1]{0}', space=sflag, size = 0x4, scoped, tag = 'scoped memory for textcnn_forward.1']
    #allocation7 [shape = 'u8[1024]{0}', space=vmem, size = 0x400, scoped, tag = 'output window, operand 0, single buffered']
    %9 = vsyncpa [#allocation4], 0
    %10 = vsyncpa [#allocation6], 0
    %11 = vsyncpa [#allocation3], 0
    // Predicated region
    $region2: #{textcnn_forward.1} parent=1 // pred_check
      _
    $region3: #{textcnn_forward.1} parent=1 // pred_check_branch
      %13 = sbr.rel (0) target = $region5
    $region4: #{textcnn_forward.1} parent=1 // pred_region
      _
    $region5: #{textcnn_forward.1} parent=1 // pred_fallthru
      _
    // Predicated region
    $region6: #{textcnn_forward.1} parent=1 // pred_check
      _
    $region7: #{textcnn_forward.1} parent=1 // pred_check_branch
      %15 = sbr.rel (0) target = $region9
    $region8: #{textcnn_forward.1} parent=1 // pred_region
      _
    $region9: #{textcnn_forward.1} parent=1 // pred_fallthru
      _
    // Predicated region
    $region10: #{textcnn_forward.1} parent=1 // pred_check
      _
    $region11: #{textcnn_forward.1} parent=1 // pred_check_branch
      %17 = sbr.rel (0) target = $region13
    $region12: #{textcnn_forward.1} parent=1 // pred_region
      %s19 = ssub.s32 64, 64
      %20 = vsyncadd [#allocation4], %s19
      %s22 = sshll.u32 %s2, 4
      %s23 = int_to_ptr.vmem [resolvable:$true] %s22
      %25 = dma.vmem_to_smem %s23, 64, [#allocation2], [#allocation4]
    $region13: #{textcnn_forward.1} parent=1 // pred_fallthru
      _
    // Predicated region
    $region14: #{textcnn_forward.1} parent=1 // pred_check
      _
    $region15: #{textcnn_forward.1} parent=1 // pred_check_branch
      %27 = sbr.rel (0) target = $region17
    $region16: #{textcnn_forward.1} parent=1 // pred_region
      %s29 = ssub.s32 16, 16
      %30 = vsyncadd [#allocation6], %s29
      %s32 = sshll.u32 %s3, 4
      %s33 = int_to_ptr.vmem [resolvable:$true] %s32
      %35 = dma.vmem_to_smem %s33, 16, [#allocation5], [#allocation6]
    $region17: #{textcnn_forward.1} parent=1 // pred_fallthru
      _
    // Predicated region
    $region18: #{textcnn_forward.1} parent=1 // pred_check
      _
    $region19: #{textcnn_forward.1} parent=1 // pred_check_branch
      %37 = sbr.rel (0) target = $region21
    $region20: #{textcnn_forward.1} parent=1 // pred_region
      %38 = dma.done [#allocation4], 64
    $region21: #{textcnn_forward.1} parent=1 // pred_fallthru
      _
    // Predicated region
    $region22: #{textcnn_forward.1} parent=1 // pred_check
      _
    $region23: #{textcnn_forward.1} parent=1 // pred_check_branch
      %40 = sbr.rel (0) target = $region25
    $region24: #{textcnn_forward.1} parent=1 // pred_region
      %41 = dma.done [#allocation6], 16
    $region25: #{textcnn_forward.1} parent=1 // pred_fallthru
      _
    %42 = sfence
    %v44 = vld [vmem:[%s0] sm:$0xff]
    %v45 = vld [vmem:[%s0 + $0x8] sm:$0xff]
    %v46 = vpack.c.bf16 %v45, %v44
    %v47 = vld [vmem:[%s1] sm:$0xf]
    %v48 = vld [vmem:[%s1 + $0x4] sm:$0xf]
    %v49 = vld [vmem:[%s1 + $0x8] sm:$0xf]
    %v50 = vld [vmem:[%s1 + $0xc] sm:$0xf]
    %v51 = vld [vmem:[%s1 + $0x10] sm:$0xf]
    %v52 = vld [vmem:[%s1 + $0x14] sm:$0xf]
    %v53 = vld [vmem:[%s1 + $0x18] sm:$0xf]
    %v54 = vld [vmem:[%s1 + $0x1c] sm:$0xf]
    %v55 = vld [vmem:[%s1 + $0x20] sm:$0xf]
    %v56 = vld [vmem:[%s1 + $0x24] sm:$0xf]
    %v57 = vld [vmem:[%s1 + $0x28] sm:$0xf]
    %v58 = vld [vmem:[%s1 + $0x2c] sm:$0xf]
    %v59 = vld [vmem:[%s1 + $0x30] sm:$0x3]
    %v73 = vunpack.c.l.b16 %v47
    %v74 = vunpack.c.l.b16 %v48
    %v75 = vunpack.c.l.b16 %v49
    %v76 = vunpack.c.l.b16 %v50
    %v77 = vunpack.c.l.b16 %v51
    %v78 = vunpack.c.l.b16 %v52
    %v79 = vunpack.c.l.b16 %v53
    %v80 = vunpack.c.l.b16 %v54
    %v81 = vunpack.c.l.b16 %v55
    %v82 = vunpack.c.l.b16 %v56
    %v83 = vunpack.c.l.b16 %v57
    %v84 = vunpack.c.l.b16 %v58
    %v85 = vunpack.c.l.b16 %v59
    %v86 = vpack.c.b16 %v74, %v73
    %v87 = vpack.c.b16 %v76, %v75
    %v88 = vpack.c.b16 %v78, %v77
    %v89 = vpack.c.b16 %v80, %v79
    %v90 = vpack.c.b16 %v82, %v81
    %v91 = vpack.c.b16 %v84, %v83
    %v92 = vpack.c.b16 %v85, %v85
    %vm99 = vcmask 818176
    %v101 = vsel %vm99, %v46, 0
    %vm103 = vcmask 1041408
    %v105 = vsel %vm103, %v92, 0
    %107 = vmatprep.subr.bf16.mxu0 0
    %108 = vmatpush1.bf16.msra.mxu0 %v86
    %109 = vmatprep.subr.bf16.mxu0 0
    %110 = vmatpush1.bf16.msra.mxu0 %v87
    %111 = vmatprep.subr.bf16.mxu0 0
    %112 = vmatpush1.bf16.msra.mxu0 %v88
    %113 = vmatprep.subr.bf16.mxu0 0
    %114 = vmatpush1.bf16.msra.mxu0 %v89
    %115 = vmatprep.subr.bf16.mxu0 0
    %116 = vmatpush1.bf16.msra.mxu0 %v90
    %117 = vmatprep.subr.bf16.mxu0 0
    %118 = vmatpush1.bf16.msra.mxu0 %v91
    %119 = vmatprep.subr.bf16.mxu0 0
    %120 = vmatpush1.bf16.msra.mxu0 %v105
    %121 = vmatprep.subr.bf16.mxu0 0
    %122 = vmatpush1.bf16.msra.mxu0 0
    %123 = vmatprep.subr.bf16.mxu0 0
    %124 = vmatpush1.bf16.msra.mxu0 0
    %125 = vmatprep.subr.bf16.mxu0 0
    %126 = vmatpush1.bf16.msra.mxu0 0
    %127 = vmatprep.subr.bf16.mxu0 0
    %128 = vmatpush1.bf16.msra.mxu0 0
    %129 = vmatprep.subr.bf16.mxu0 0
    %130 = vmatpush1.bf16.msra.mxu0 0
    %131 = vmatprep.subr.bf16.mxu0 0
    %132 = vmatpush1.bf16.msra.mxu0 0
    %133 = vmatprep.subr.bf16.mxu0 0
    %134 = vmatpush1.bf16.msra.mxu0 0
    %135 = vmatprep.subr.bf16.mxu0 0
    %136 = vmatpush1.bf16.msra.mxu0 0
    %137 = vmatprep.subr.bf16.mxu0 0
    %138 = vmatpush1.bf16.msra.mxu0 0
    %139 = vmatprep.mubr.bf16.mxu0 0
    %140 = vmatmul.mubr.bf16.gmra.mrb[0].mxu0 %v101
    %v141 = vpop.f32.mrb[0].mxu0
    %v142 = vadd.f32 0.0, %v141
    %v143 = vpop.f32.mrb[0].mxu0
    %v144 = vpop.f32.mrb[0].mxu0
    %v145 = vadd.f32 0.0, %v144
    %v146 = vpop.f32.mrb[0].mxu0
    %147 = vdwg.mxu0
    %150 = vrot.lane.b32.xlu0 %v142, 125
    %v151 = vpop.permute.xlu0 %150
    %152 = vrot.lane.b32.xlu0 %v145, 125
    %v153 = vpop.permute.xlu0 %152
    %v156 = vrot.slane %v151, 1
    %v157 = vrot.slane %v153, 1
    %v158 = vlaneseq
    %v159 = vshrl.u32 %v158, 7
    %vm160 = vcmp.lt.s32.totalorder %v159, 7
    %v161 = vsel %vm160, %v156, %v157
    %v162 = vsel %vm160, %v157, %v156
    %v163 = vadd.f32 %v142, %v161
    %v164 = vadd.f32 %v145, %v162
    %165 = vrot.lane.b32.xlu0 %v142, 122
    %v166 = vpop.permute.xlu0 %165
    %167 = vrot.lane.b32.xlu0 %v145, 122
    %v168 = vpop.permute.xlu0 %167
    %v171 = vrot.slane %v166, 2
    %v172 = vrot.slane %v168, 2
    %vm173 = vcmp.lt.s32.totalorder %v159, 6
    %v174 = vsel %vm173, %v171, %v172
    %v175 = vsel %vm173, %v172, %v171
    %v176 = vadd.f32 %v163, %v174
    %v177 = vadd.f32 %v164, %v175
    %178 = vrot.lane.b32.xlu0 %v142, 119
    %v179 = vpop.permute.xlu0 %178
    %180 = vrot.lane.b32.xlu0 %v145, 119
    %v181 = vpop.permute.xlu0 %180
    %v184 = vrot.slane %v179, 3
    %v185 = vrot.slane %v181, 3
    %vm186 = vcmp.lt.s32.totalorder %v159, 5
    %v187 = vsel %vm186, %v184, %v185
    %v188 = vsel %vm186, %v185, %v184
    %v189 = vadd.f32 %v176, %v187
    %v190 = vadd.f32 %v177, %v188
    %191 = vrot.lane.b32.xlu0 %v142, 116
    %v192 = vpop.permute.xlu0 %191
    %193 = vrot.lane.b32.xlu0 %v145, 116
    %v194 = vpop.permute.xlu0 %193
    %v197 = vrot.slane %v192, 4
    %v198 = vrot.slane %v194, 4
    %vm199 = vcmp.lt.s32.totalorder %v159, 4
    %v200 = vsel %vm199, %v197, %v198
    %v201 = vsel %vm199, %v198, %v197
    %v202 = vadd.f32 %v189, %v200
    %v203 = vadd.f32 %v190, %v201
    %vm204 = vcmask 5120
    %v205 = vsel %vm204, %v202, -inf
    %v206 = vrot.slane %v205, 4
    %v207 = vmax.f32 %v205, %v206
    %v208 = vrot.slane %v207, 2
    %v209 = vmax.f32 %v207, %v208
    %v210 = vrot.slane %v209, 1
    %v211 = vmax.f32 %v209, %v210
    %v212 = vsel %vm204, %v203, -inf
    %v213 = vrot.slane %v212, 4
    %v214 = vmax.f32 %v212, %v213
    %v215 = vrot.slane %v214, 2
    %v216 = vmax.f32 %v214, %v215
    %v217 = vrot.slane %v216, 1
    %v218 = vmax.f32 %v216, %v217
    %vm219 = vcmask 12296
    %v220 = vsel %vm219, %v202, -inf
    %v221 = vrot.slane %v220, 4
    %v222 = vmax.f32 %v220, %v221
    %v223 = vrot.slane %v222, 2
    %v224 = vmax.f32 %v222, %v223
    %v225 = vrot.slane %v224, 1
    %v226 = vmax.f32 %v224, %v225
    %v227 = vsel %vm219, %v203, -inf
    %v228 = vrot.slane %v227, 4
    %v229 = vmax.f32 %v227, %v228
    %v230 = vrot.slane %v229, 2
    %v231 = vmax.f32 %v229, %v230
    %v232 = vrot.slane %v231, 1
    %v233 = vmax.f32 %v231, %v232
    %vm234 = vcmask 19472
    %v235 = vsel %vm234, %v202, -inf
    %v236 = vrot.slane %v235, 4
    %v237 = vmax.f32 %v235, %v236
    %v238 = vrot.slane %v237, 2
    %v239 = vmax.f32 %v237, %v238
    %v240 = vrot.slane %v239, 1
    %v241 = vmax.f32 %v239, %v240
    %v242 = vsel %vm234, %v203, -inf
    %v243 = vrot.slane %v242, 4
    %v244 = vmax.f32 %v242, %v243
    %v245 = vrot.slane %v244, 2
    %v246 = vmax.f32 %v244, %v245
    %v247 = vrot.slane %v246, 1
    %v248 = vmax.f32 %v246, %v247
    %vm251 = vcmask 1041409
    %v252 = vsel %vm251, %v218, %v211
    %v256 = vsel %vm251, %v233, %v226
    %v260 = vsel %vm251, %v248, %v241
    %vm262 = vcmask 7168
    %v263 = vsel %vm262, %v252, %v256
    %vm264 = vcmask 15360
    %v265 = vsel %vm264, %v263, %v260
    %s266 = sld [smem:[#allocation5]]
    %s267 = sld [smem:[#allocation2]]
    %v268 = vstv %s267
    %v269 = vmul.f32 %v265, %v268
    %v270 = vstv %s266
    %v271 = vadd.f32 %v270, %v269
    %s272 = sld [smem:[#allocation2 + $0x80]]
    %v273 = vstv %s272
    %v274 = vmul.f32 %v265, %v273
    %276 = vrot.lane.b32.xlu0 %v274, 127
    %v277 = vpop.permute.xlu0 %276
    %v279 = vadd.f32 %v271, %v277
    %s280 = sld [smem:[#allocation2 + $0x100]]
    %v281 = vstv %s280
    %v282 = vmul.f32 %v265, %v281
    %284 = vrot.lane.b32.xlu0 %v282, 126
    %v285 = vpop.permute.xlu0 %284
    %v287 = vadd.f32 %v279, %v285
    %s288 = sld [smem:[#allocation5 + $0x1]]
    %s289 = sld [smem:[#allocation2 + $0x1]]
    %v290 = vstv %s289
    %v291 = vmul.f32 %v265, %v290
    %v292 = vstv %s288
    %v293 = vadd.f32 %v292, %v291
    %s294 = sld [smem:[#allocation2 + $0x81]]
    %v295 = vstv %s294
    %v296 = vmul.f32 %v265, %v295
    %298 = vrot.lane.b32.xlu0 %v296, 127
    %v299 = vpop.permute.xlu0 %298
    %v301 = vadd.f32 %v293, %v299
    %s302 = sld [smem:[#allocation2 + $0x101]]
    %v303 = vstv %s302
    %v304 = vmul.f32 %v265, %v303
    %306 = vrot.lane.b32.xlu0 %v304, 126
    %v307 = vpop.permute.xlu0 %306
    %v309 = vadd.f32 %v301, %v307
    %311 = vrot.lane.b32.xlu0 %v309, 1
    %v312 = vpop.permute.xlu0 %311
    %v314 = vsel %vm262, %v287, %v312
    %vm315 = vcmask 9216
    %v316 = vsel %vm315, %v314, -inf
    %317 = vmax.xlane.f32.xlu0 %v316
    %v318 = vpop.xlane.xlu0 %317
    %v319 = vsub.f32 %v314, %v318
    %v320 = vmul.f32 %v319, 1.442695
    %v321 = vpow.pop %v320
    %v322 = vsel %vm315, %v321, 0.0
    %323 = vadd.xlane.f32.xlu0 %v322
    %v324 = vpop.xlane.xlu0 %323
    %v325 = vrcp.pop %v324
    %v326 = vmul.f32 %v321, %v325
    %327 = vst.msk [vmem:[#allocation7] sm:$0x3] %vm315, %v326
    // Predicated region
    $region26: #{textcnn_forward.1} parent=1 // pred_check
      _
    $region27: #{textcnn_forward.1} parent=1 // pred_check_branch
      %329 = sbr.rel (0) target = $region29
    $region28: #{textcnn_forward.1} parent=1 // pred_region
      %s331 = ssub.s32 32, 32
      %332 = vsyncadd [#allocation3], %s331
      %s334 = sshll.u32 [#allocation7], 4
      %s335 = int_to_ptr.vmem [resolvable:$true] %s334
      %337 = dma.vmem_to_hbm [thread:$0]  %s335, 32, %s4, [#allocation3]
    $region29: #{textcnn_forward.1} parent=1 // pred_fallthru
      _
    // Predicated region
    $region30: #{textcnn_forward.1} parent=1 // pred_check
      _
    $region31: #{textcnn_forward.1} parent=1 // pred_check_branch
      %339 = sbr.rel (0) target = $region33
    $region32: #{textcnn_forward.1} parent=1 // pred_region
      %340 = dma.done [#allocation3], 32
    $region33: #{textcnn_forward.1} parent=1 // pred_fallthru
      _
    %341 = vsyncpa [#allocation3], 1
    %342 = vsyncpa [#allocation4], 1
    %343 = vsyncpa [#allocation6], 1

</llo_original>
